<compile_context>
chip_gen: v7x
topology: tpu7x:2x2x1
jax: 0.10.0
libtpu: 0.0.40
codegen_flags: <defaults>
</compile_context>

<pallas_src>
import jax
import jax.numpy as jnp
from jax.experimental import pallas as pl
from jax.experimental.pallas import tpu as pltpu


def _softmax_rows(x):
    """Numerically-stable softmax over the last (lane) axis."""
    m = jnp.max(x, axis=-1, keepdims=True)
    e = jnp.exp(x - m)
    denom = jnp.sum(e, axis=-1, keepdims=True)
    # exact reciprocal keeps bit-level parity with the jnp reference softmax
    return e * pl.reciprocal(denom, approx=False)


def _scatter_value(sm, out_shape3):
    """(TB, T) softmax -> (TB, T, step) with the value at step-offset 0."""
    pos = jax.lax.broadcasted_iota(jnp.int32, out_shape3, 2)
    return jnp.where(pos == 0, sm[:, :, None], jnp.float32(0.0))


def _impulse_kernel(x_ref, out_ref):
    sm = _softmax_rows(x_ref[...])
    out_ref[...] = _scatter_value(sm, out_ref.shape)


def _impulse_kernel_with_logits(x_ref, out_ref, sm_ref):
    sm = _softmax_rows(x_ref[...])
    sm_ref[...] = sm
    out_ref[...] = _scatter_value(sm, out_ref.shape)


def _pick_batch_tile(batch, final_size):
    """Batch tile: multiple of 8 (f32 sublane), ~4 MiB output tile max."""
    bytes_per_row = final_size * 4
    tb = (4 * 1024 * 1024) // max(bytes_per_row, 1)
    tb = max(8, min(512, (tb // 8) * 8))
    # don't pad tiny batches up to a huge tile
    batch_rounded = ((batch + 7) // 8) * 8
    return min(tb, batch_rounded)


def impulse_generator(x, final_size, return_logits=False):
    """x: (batch, time) float32.

    Returns (batch, 1, final_size) [, (batch, 1, time)] matching the PyTorch
    module's forward.
    """
    batch, time = x.shape
    assert final_size % time == 0, (
        "final_size must be divisible by time (PyTorch step slicing)")
    step = final_size // time

    x = x.astype(jnp.float32)

    tb = _pick_batch_tile(batch, final_size)
    b_pad = pl.cdiv(batch, tb) * tb
    if b_pad != batch:
        # padded rows produce softmax(0)=1/T rows that are sliced off below;
        # rows are independent so valid rows are unaffected.
        x_p = jnp.pad(x, ((0, b_pad - batch), (0, 0)))
    else:
        x_p = x

    grid = (b_pad // tb,)
    in_specs = [pl.BlockSpec((tb, time), lambda i: (i, 0))]
    out_spec3 = pl.BlockSpec((tb, time, step), lambda i: (i, 0, 0))
    compiler_params = pltpu.CompilerParams(
        dimension_semantics=("parallel",))

    if return_logits:
        out3, sm = pl.pallas_call(
            _impulse_kernel_with_logits,
            out_shape=(
                jax.ShapeDtypeStruct((b_pad, time, step), jnp.float32),
                jax.ShapeDtypeStruct((b_pad, time), jnp.float32),
            ),
            grid=grid,
            in_specs=in_specs,
            out_specs=(
                out_spec3,
                pl.BlockSpec((tb, time), lambda i: (i, 0)),
            ),
            compiler_params=compiler_params,
        )(x_p)
        out = out3[:batch].reshape(batch, 1, final_size)   # free: contiguous
        logits = sm[:batch].reshape(batch, 1, time)
        return out, logits

    out3 = pl.pallas_call(
        _impulse_kernel,
        out_shape=jax.ShapeDtypeStruct((b_pad, time, step), jnp.float32),
        grid=grid,
        in_specs=in_specs,
        out_specs=out_spec3,
        compiler_params=compiler_params,
    )(x_p)
    return out3[:batch].reshape(batch, 1, final_size)       # free: contiguous


if __name__ == "__main__":
    key = jax.random.PRNGKey(0)
    batch, time, final_size = 4, 8, 128   # step = 16

    x = jax.random.normal(key, (batch, time), dtype=jnp.float32)

    # with logits
    out, logits = impulse_generator(x, final_size, return_logits=True)
    out = jax.block_until_ready(out)
    logits = jax.block_until_ready(logits)

    # without logits (separate, cheaper kernel variant)
    out_nl = jax.block_until_ready(impulse_generator(x, final_size))

    # reference check against plain JAX
    sm_ref = jax.nn.softmax(x, axis=-1)
    step = final_size // time
    ref = jnp.zeros((batch, 1, final_size), jnp.float32)
    ref = ref.at[:, :, ::step].set(sm_ref[:, None, :])

    assert out.shape == (batch, 1, final_size)
    assert logits.shape == (batch, 1, time)
    assert out_nl.shape == (batch, 1, final_size)
    assert jnp.allclose(out, ref, atol=1e-5), "mismatch vs reference scatter-softmax"
    assert jnp.allclose(out_nl, ref, atol=1e-5), "mismatch vs reference (no-logits path)"
    assert jnp.allclose(logits[:, 0, :], sm_ref, atol=1e-5), "mismatch vs reference softmax"

    print("KERNEL_OK")
</pallas_src>

<mosaic_0001>
module attributes {stable_mosaic.version = 11 : i64} {
  func.func @_impulse_kernel_with_logits(%arg0: i32, %arg1: memref<8x8xf32, #tpu.memory_space<vmem>>, %arg2: memref<8x8x16xf32, #tpu.memory_space<vmem>>, %arg3: memref<8x8xf32, #tpu.memory_space<vmem>>) attributes {dimension_semantics = [#tpu.dimension_semantics<parallel>], iteration_bounds = array<i64: 1>, scalar_prefetch = 0 : i64, scratch_operands = 0 : i64, tpu.core_type = #tpu.core_type<tc>, window_params = [{transform_indices = @transform_0, window_bounds = array<i64: 8, 8>}, {transform_indices = @transform_1, window_bounds = array<i64: 8, 8, 16>}, {transform_indices = @transform_2, window_bounds = array<i64: 8, 8>}]} {
    %c0 = arith.constant 0 : index
    %c0_0 = arith.constant 0 : index
    %0 = vector.load %arg1[%c0, %c0_0] : memref<8x8xf32, #tpu.memory_space<vmem>>, vector<8x8xf32>
    %cst = arith.constant dense<0xFF800000> : vector<8xf32>
    %1 = vector.multi_reduction <maximumf>, %0, %cst [1] : vector<8x8xf32> to vector<8xf32>
    %2 = vector.shape_cast %1 : vector<8xf32> to vector<8x1xf32>
    %3 = vector.broadcast %2 : vector<8x1xf32> to vector<8x8xf32>
    %4 = arith.subf %0, %3 : vector<8x8xf32>
    %5 = math.exp %4 : vector<8x8xf32>
    %cst_1 = arith.constant dense<0.000000e+00> : vector<8xf32>
    %6 = vector.multi_reduction <add>, %5, %cst_1 [1] : vector<8x8xf32> to vector<8xf32>
    %7 = vector.shape_cast %6 : vector<8xf32> to vector<8x1xf32>
    %8 = tpu.reciprocal %7 : vector<8x1xf32> -> vector<8x1xf32>
    %9 = vector.broadcast %8 : vector<8x1xf32> to vector<8x8xf32>
    %10 = arith.mulf %5, %9 : vector<8x8xf32>
    %c0_2 = arith.constant 0 : index
    %c0_3 = arith.constant 0 : index
    %11 = vector.load %arg3[%c0_2, %c0_3] : memref<8x8xf32, #tpu.memory_space<vmem>>, vector<8x8xf32>
    tpu.vector_store %arg3[%c0_2, %c0_3], %10 {strides = array<i32>} : memref<8x8xf32, #tpu.memory_space<vmem>>, vector<8x8xf32>,
    %12 = tpu.iota {dimensions = array<i32: 2>} : vector<8x8x16xi32>
    %c0_i32 = arith.constant 0 : i32
    %13 = vector.broadcast %c0_i32 : i32 to vector<8x8x16xi32>
    %14 = arith.cmpi eq, %12, %13 : vector<8x8x16xi32>
    %15 = vector.shape_cast %10 : vector<8x8xf32> to vector<8x8x1xf32>
    %cst_4 = arith.constant 0.000000e+00 : f32
    %16 = vector.shape_cast %15 : vector<8x8x1xf32> to vector<8x8x1xf32>
    %17 = vector.broadcast %16 : vector<8x8x1xf32> to vector<8x8x16xf32>
    %18 = vector.broadcast %cst_4 : f32 to vector<8x8x16xf32>
    %19 = arith.select %14, %17, %18 : vector<8x8x16xi1>, vector<8x8x16xf32>
    %c0_5 = arith.constant 0 : index
    %c0_6 = arith.constant 0 : index
    %c0_7 = arith.constant 0 : index
    %20 = vector.load %arg2[%c0_5, %c0_6, %c0_7] : memref<8x8x16xf32, #tpu.memory_space<vmem>>, vector<8x8x16xf32>
    tpu.vector_store %arg2[%c0_5, %c0_6, %c0_7], %19 {strides = array<i32>} : memref<8x8x16xf32, #tpu.memory_space<vmem>>, vector<8x8x16xf32>,
    return
  }
  func.func @transform_0(%arg0: i32) -> (i32, i32) {
    %c0_i32 = arith.constant 0 : i32
    %c0_i32_0 = arith.constant 0 : i32
    return %arg0, %c0_i32 : i32, i32
  }
  func.func @transform_1(%arg0: i32) -> (i32, i32, i32) {
    %c0_i32 = arith.constant 0 : i32
    %c0_i32_0 = arith.constant 0 : i32
    %c0_i32_1 = arith.constant 0 : i32
    return %arg0, %c0_i32, %c0_i32_0 : i32, i32, i32
  }
  func.func @transform_2(%arg0: i32) -> (i32, i32) {
    %c0_i32 = arith.constant 0 : i32
    %c0_i32_0 = arith.constant 0 : i32
    return %arg0, %c0_i32 : i32, i32
  }
}

</mosaic_0001>

<llo_original>
// kernel: tpu_custom_call.1
$region0: #{tpu_custom_call.1}
  #allocation0 [shape = 'u32[]', space=smem, size = 0x4, offset = 0x4, fixed_abs, tag = 'smem constant byte address 0x4 - core index']
  #allocation1 [shape = 'u32[144,128]{1,0:T(1,128)}', space=vmem, size = 0x12000, scoped, tag = 'internal scratch']
  %s0 = inlined_call_operand.hbm [shape: f32[8,8], index: 0, kind: input, shape index: {}]
  %s1 = inlined_call_operand.hbm [shape: f32[8,8,16], index: 1, kind: output, shape index: {0}]
  %s2 = inlined_call_operand.hbm [shape: f32[8,8], index: 2, kind: output, shape index: {1}]
  %3 = xla_tuple %s1, %s2
  %s4 = sld [smem:[#allocation0]]
  $region26: #{tpu_custom_call.1} parent=0
    _
  %s6 = ssub.s32 1, %s4
  %s7 = scalar_select 0, %s6, %s4
  $region1: #{tpu_custom_call.1} parent=0
    #allocation2 [shape = 'u8[4096]{0}', space=vmem, size = 0x1000, scoped, tag = 'input window, operand 0, single buffered']
    #allocation3 [shape = 's32[1]{0}', space=sflag, size = 0x4, scoped, tag = 'scoped memory for tpu_custom_call.1']
    #allocation4 [shape = 's32[1]{0}', space=sflag, size = 0x4, scoped, tag = 'scoped memory for tpu_custom_call.1']
    #allocation5 [shape = 'u8[32768]{0}', space=vmem, size = 0x8000, scoped, tag = 'output window, operand 0, single buffered']
    #allocation6 [shape = 'u8[4096]{0}', space=vmem, size = 0x1000, scoped, tag = 'output window, operand 1, single buffered']
    #allocation7 [shape = 's32[1]{0}', space=sflag, size = 0x4, scoped, tag = 'scoped memory for tpu_custom_call.1']
    %8 = vsyncpa [#allocation3], 0
    %9 = vsyncpa [#allocation4], 0
    %10 = vsyncpa [#allocation7], 0
    // Predicated region
    $region2: #{tpu_custom_call.1} parent=1 // pred_check
      _
    $region3: #{tpu_custom_call.1} parent=1 // pred_check_branch
      %12 = sbr.rel (0) target = $region5
    $region4: #{tpu_custom_call.1} parent=1 // pred_region
      %s14 = ssub.s32 128, 128
      %15 = vsyncadd [#allocation3], %s14
      %s17 = sshll.u32 [#allocation2], 4
      %s18 = int_to_ptr.vmem [resolvable:$true] %s17
      %20 = dma.hbm_to_vmem [thread:$0]  %s0, 128, %s18, [#allocation3]
    $region5: #{tpu_custom_call.1} parent=1 // pred_fallthru
      _
    // Predicated region
    $region6: #{tpu_custom_call.1} parent=1 // pred_check
      _
    $region7: #{tpu_custom_call.1} parent=1 // pred_check_branch
      %22 = sbr.rel (0) target = $region9
    $region8: #{tpu_custom_call.1} parent=1 // pred_region
      %23 = dma.done [#allocation3], 128
    $region9: #{tpu_custom_call.1} parent=1 // pred_fallthru
      _
    %v24 = vld [vmem:[#allocation2] sm:$0xff]
    %vm25 = vcmask 64512
    %v26 = vsel %vm25, %v24, -inf
    %27 = vmax.xlane.f32.xlu0 %v26
    %v28 = vpop.xlane.xlu0 %27
    %v29 = vsub.f32 %v24, %v28
    %v30 = vmul.f32 %v29, 1.442695
    %v31 = vpow.pop %v30
    %v32 = vsel %vm25, %v31, 0.0
    %33 = vadd.xlane.f32.xlu0 %v32
    %v34 = vpop.xlane.xlu0 %33
    %v35 = vrcp.pop %v34
    %v36 = vmul.f32 %v31, %v35
    %37 = vst.msk [vmem:[#allocation6] sm:$0xff] %vm25, %v36
    %v38 = vlaneseq
    %v39 = vand.u32 %v38, 127
    %vm40 = vcmp.eq.s32.totalorder %v39, 0
    %v41 = vlaneseq
    %v42 = vshrl.u32 %v41, 7
    %v43 = vsub.s32 0, %v42
    %v44 = vrot.slane %v36, %v43
    %46 = vbcast.lane.b32.xlu0 %v44, 256
    %v47 = vpop.permute.xlu0 %46
    %v48 = vlaneseq
    %v49 = vshrl.u32 %v48, 7
    %v50 = vsub.s32 1, %v49
    %v51 = vrot.slane %v36, %v50
    %53 = vbcast.lane.b32.xlu0 %v51, 256
    %v54 = vpop.permute.xlu0 %53
    %v55 = vlaneseq
    %v56 = vshrl.u32 %v55, 7
    %v57 = vsub.s32 2, %v56
    %v58 = vrot.slane %v36, %v57
    %60 = vbcast.lane.b32.xlu0 %v58, 256
    %v61 = vpop.permute.xlu0 %60
    %v62 = vlaneseq
    %v63 = vshrl.u32 %v62, 7
    %v64 = vsub.s32 3, %v63
    %v65 = vrot.slane %v36, %v64
    %67 = vbcast.lane.b32.xlu0 %v65, 256
    %v68 = vpop.permute.xlu0 %67
    %v69 = vlaneseq
    %v70 = vshrl.u32 %v69, 7
    %v71 = vsub.s32 4, %v70
    %v72 = vrot.slane %v36, %v71
    %74 = vbcast.lane.b32.xlu0 %v72, 256
    %v75 = vpop.permute.xlu0 %74
    %v76 = vlaneseq
    %v77 = vshrl.u32 %v76, 7
    %v78 = vsub.s32 5, %v77
    %v79 = vrot.slane %v36, %v78
    %81 = vbcast.lane.b32.xlu0 %v79, 256
    %v82 = vpop.permute.xlu0 %81
    %v83 = vlaneseq
    %v84 = vshrl.u32 %v83, 7
    %v85 = vsub.s32 6, %v84
    %v86 = vrot.slane %v36, %v85
    %88 = vbcast.lane.b32.xlu0 %v86, 256
    %v89 = vpop.permute.xlu0 %88
    %v90 = vlaneseq
    %v91 = vshrl.u32 %v90, 7
    %v92 = vsub.s32 7, %v91
    %v93 = vrot.slane %v36, %v92
    %95 = vbcast.lane.b32.xlu0 %v93, 256
    %v96 = vpop.permute.xlu0 %95
    %v97 = vsel %vm40, %v47, 0.0
    %v98 = vsel %vm40, %v54, 0.0
    %v99 = vsel %vm40, %v61, 0.0
    %v100 = vsel %vm40, %v68, 0.0
    %v101 = vsel %vm40, %v75, 0.0
    %v102 = vsel %vm40, %v82, 0.0
    %v103 = vsel %vm40, %v89, 0.0
    %v104 = vsel %vm40, %v96, 0.0
    %vm105 = vcmask 130048
    %106 = vst.msk [vmem:[#allocation5] sm:$0xff] %vm105, %v97
    %107 = vst.msk [vmem:[#allocation5 + $0x8] sm:$0xff] %vm105, %v98
    %108 = vst.msk [vmem:[#allocation5 + $0x10] sm:$0xff] %vm105, %v99
    %109 = vst.msk [vmem:[#allocation5 + $0x18] sm:$0xff] %vm105, %v100
    %110 = vst.msk [vmem:[#allocation5 + $0x20] sm:$0xff] %vm105, %v101
    %111 = vst.msk [vmem:[#allocation5 + $0x28] sm:$0xff] %vm105, %v102
    %112 = vst.msk [vmem:[#allocation5 + $0x30] sm:$0xff] %vm105, %v103
    %113 = vst.msk [vmem:[#allocation5 + $0x38] sm:$0xff] %vm105, %v104
    // Predicated region
    $region10: #{tpu_custom_call.1} parent=1 // pred_check
      _
    $region11: #{tpu_custom_call.1} parent=1 // pred_check_branch
      %115 = sbr.rel (0) target = $region13
    $region12: #{tpu_custom_call.1} parent=1 // pred_region
      %s117 = ssub.s32 1024, 1024
      %118 = vsyncadd [#allocation4], %s117
      %s119 = sshll.u32 [#allocation5], 4
      %s120 = int_to_ptr.vmem [resolvable:$true] %s119
      %125 = dma.vmem_to_hbm [thread:$0]  %s120, 1024, %s1, [#allocation4], 128, 128, 8
    $region13: #{tpu_custom_call.1} parent=1 // pred_fallthru
      _
    // Predicated region
    $region14: #{tpu_custom_call.1} parent=1 // pred_check
      _
    $region15: #{tpu_custom_call.1} parent=1 // pred_check_branch
      %127 = sbr.rel (0) target = $region17
    $region16: #{tpu_custom_call.1} parent=1 // pred_region
      %s129 = ssub.s32 128, 128
      %130 = vsyncadd [#allocation7], %s129
      %s132 = sshll.u32 [#allocation6], 4
      %s133 = int_to_ptr.vmem [resolvable:$true] %s132
      %135 = dma.vmem_to_hbm [thread:$0]  %s133, 128, %s2, [#allocation7]
    $region17: #{tpu_custom_call.1} parent=1 // pred_fallthru
      _
    // Predicated region
    $region18: #{tpu_custom_call.1} parent=1 // pred_check
      _
    $region19: #{tpu_custom_call.1} parent=1 // pred_check_branch
      %137 = sbr.rel (0) target = $region21
    $region20: #{tpu_custom_call.1} parent=1 // pred_region
      %138 = dma.done [#allocation4], 1024
    $region21: #{tpu_custom_call.1} parent=1 // pred_fallthru
      _
    // Predicated region
    $region22: #{tpu_custom_call.1} parent=1 // pred_check
      _
    $region23: #{tpu_custom_call.1} parent=1 // pred_check_branch
      %140 = sbr.rel (0) target = $region25
    $region24: #{tpu_custom_call.1} parent=1 // pred_region
      %141 = dma.done [#allocation7], 128
    $region25: #{tpu_custom_call.1} parent=1 // pred_fallthru
      _
    %142 = vsyncpa [#allocation3], 1
    %143 = vsyncpa [#allocation4], 1
    %144 = vsyncpa [#allocation7], 1

</llo_original>
